<compile_context>
chip_gen: v5e
topology: v5e:2x2
jax: 0.10.0
libtpu: 0.0.40
codegen_flags: <defaults>
</compile_context>

<pallas_src>
import functools

import jax
import jax.numpy as jnp
from jax.experimental import pallas as pl
from jax.experimental.pallas import tpu as pltpu


# --------------------------------------------------------------------------
# Compile-time capability probe (AOT lower+compile only; never executed).
# --------------------------------------------------------------------------
@functools.lru_cache(maxsize=None)
def _single_buffer_resident_supported() -> bool:
    """Does this JAX/Mosaic accept pl.Buffered(1) for a loop-invariant operand?"""
    if not hasattr(pl, "Buffered"):
        return False

    def _probe_kernel(x_ref, w_ref, o_ref):
        o_ref[...] = jnp.dot(x_ref[...], w_ref[...],
                             preferred_element_type=jnp.float32)

    try:
        call = pl.pallas_call(
            _probe_kernel,
            out_shape=jax.ShapeDtypeStruct((16, 128), jnp.float32),
            grid_spec=pltpu.PrefetchScalarGridSpec(
                num_scalar_prefetch=0,
                grid=(2,),
                in_specs=[
                    pl.BlockSpec((8, 128), lambda i: (i, 0)),
                    pl.BlockSpec((128, 128), lambda i: (0, 0),
                                 pipeline_mode=pl.Buffered(1)),
                ],
                out_specs=pl.BlockSpec((8, 128), lambda i: (i, 0)),
            ),
        )
        x = jax.ShapeDtypeStruct((16, 128), jnp.float32)
        w = jax.ShapeDtypeStruct((128, 128), jnp.float32)
        jax.jit(call).lower(x, w).compile()   # AOT only; nothing runs
        return True
    except Exception:
        return False


def _resident_spec(block_shape, index_map):
    """BlockSpec for a loop-invariant (constant index_map) operand.

    With a constant index_map a single VMEM buffer suffices; request it when
    supported (halves the resident footprint -- matters on v7x's 64 MiB VMEM).
    """
    if _single_buffer_resident_supported():
        return pl.BlockSpec(block_shape, index_map, pipeline_mode=pl.Buffered(1))
    return pl.BlockSpec(block_shape, index_map)


# --------------------------------------------------------------------------
# Kernel bodies
# --------------------------------------------------------------------------
def _ffn_output_kernel(x_ref, w_ref, b_ref, res_ref, o_ref):
    # x_ref:   (TM, I)  activation tile (already in compute dtype)
    # w_ref:   (I,  H)  weight, pre-transposed + pre-cast in the wrapper
    # b_ref:   (1,  H)  bias (f32)
    # res_ref: (TM, H)  residual tile
    # o_ref:   (TM, H)  output tile
    acc = jnp.dot(x_ref[...], w_ref[...], preferred_element_type=jnp.float32)
    # Fused bias + residual epilogue in f32; single cast on the way to the
    # lane-dense store.
    # TODO(synk): nn.Dropout is identity at inference; a training-mode path
    # would need pltpu.prng_seed + pltpu.prng_random_bits to build a keep mask.
    o_ref[...] = (
        acc + b_ref[...].astype(jnp.float32) + res_ref[...].astype(jnp.float32)
    ).astype(o_ref.dtype)


def _ffn_output_kernel_ktiled(x_ref, w_ref, b_ref, res_ref, o_ref, acc_ref):
    # Same as above but with the contraction (I) dimension tiled on the last
    # grid axis and an f32 VMEM accumulator (init / finalize via pl.when).
    k = pl.program_id(1)

    @pl.when(k == 0)
    def _():
        acc_ref[...] = jnp.zeros_like(acc_ref)

    acc_ref[...] += jnp.dot(x_ref[...], w_ref[...],
                            preferred_element_type=jnp.float32)

    @pl.when(k == pl.num_programs(1) - 1)
    def _():
        o_ref[...] = (
            acc_ref[...]
            + b_ref[...].astype(jnp.float32)
            + res_ref[...].astype(jnp.float32)
        ).astype(o_ref.dtype)


# --------------------------------------------------------------------------
# Wrapper
# --------------------------------------------------------------------------
def imiter_output(hidden_states, input_tensor, weight, bias, *,
                  tm=None, compute_dtype=jnp.bfloat16, out_dtype=None,
                  alias_residual=False):
    """IMITEROutput forward.

    hidden_states: (B, S, I) FFN intermediate activations
    input_tensor:  (B, S, H) residual
    weight:        (H, I)    nn.Linear weight (PyTorch (out, in) layout)
    bias:          (H,)      nn.Linear bias
    compute_dtype: MXU operand dtype (bf16 default; pass jnp.float32 or None
                   for full-precision operands). Accumulation is always f32.
    out_dtype:     output dtype (defaults to hidden_states.dtype); pass
                   jnp.bfloat16 if the downstream LayerNorm accepts it to
                   halve the writeback traffic.
    """
    B, S, I = hidden_states.shape
    H = input_tensor.shape[-1]
    tokens = B * S
    if out_dtype is None:
        out_dtype = hidden_states.dtype
    if compute_dtype is None:
        compute_dtype = hidden_states.dtype

    def isz(dt):
        return jnp.dtype(dt).itemsize

    # One-time wrapper-side layout + dtype prep (hoisted out of the per-step
    # kernel body; under jit with constant parameters XLA folds/caches these):
    #   * weight -> (I, H): native (M,K)x(K,N) MXU orientation, no in-kernel
    #     transpose of a loop-invariant operand.
    #   * operands narrowed to compute_dtype (bf16 default): MXU-native speed
    #     and halved HBM streaming bytes; accumulation stays f32 in-kernel.
    x2d = hidden_states.reshape(tokens, I).astype(compute_dtype)
    w_t = jnp.transpose(weight).astype(compute_dtype)        # (I, H)
    b2d = bias.reshape(1, H).astype(jnp.float32)
    r2d = input_tensor.reshape(tokens, H)

    # Hardware-derived VMEM budget with headroom (v5e/v6e 128 MiB, v7x 64 MiB).
    try:
        vmem_capacity = int(pltpu.get_tpu_info().vmem_capacity_bytes)
    except Exception:
        vmem_capacity = 64 << 20            # conservative (v7x per-TC size)
    vmem_budget = max(vmem_capacity - (8 << 20), 16 << 20)

    single_buf = _single_buffer_resident_supported()
    w_isz = isz(compute_dtype)

    # Reduction (K) tiling only when the resident weight would eat more than
    # ~1/3 of the budget (never triggers for ViLT/BERT-base-size weights).
    tk = I
    if H * I * w_isz > vmem_budget // 3:
        for cand in (2048, 1024, 512):
            if I % cand == 0 and cand < I:
                tk = cand
                break
    nk = I // tk
    weight_bufs = 1 if (nk == 1 and single_buf) else 2
    bias_bufs = 1 if single_buf else 2
    resident = weight_bufs * H * tk * w_isz + bias_bufs * H * 4

    # Token tiling: keep the MXU M-dimension fed (>=256-row tiles, up to 1024
    # when VMEM allows) and the HBM stream near roofline; a single full-extent
    # step for short sequences -- never 8..64-row tiles.
    if tm is None:
        tm = tokens
        for cand in (1024, 512, 256):
            if tokens >= 2 * cand:
                streamed = 2 * cand * (tk * isz(compute_dtype)
                                       + H * isz(r2d.dtype)
                                       + H * isz(out_dtype))
                acc_bytes = cand * H * 4 if nk > 1 else 0
                if resident + streamed + acc_bytes <= vmem_budget:
                    tm = cand
                    break
    tm = min(tm, tokens)
    if tm != tokens and tm % 8 != 0:
        raise ValueError("tm must be a multiple of 8 (sublane) or equal the token count")

    n_tok_tiles = pl.cdiv(tokens, tm)

    # Explicit VMEM limit derived from the actual tiling (2x slack, capped at
    # the hardware budget).
    streamed = 2 * tm * (tk * isz(compute_dtype) + H * isz(r2d.dtype)
                         + H * isz(out_dtype))
    acc_bytes = tm * H * 4 if nk > 1 else 0
    vmem_limit = int(min(max(32 << 20, 2 * (resident + streamed + acc_bytes)),
                         vmem_budget))

    cost = pl.CostEstimate(
        flops=2 * tokens * I * H,
        transcendentals=0,
        bytes_accessed=(x2d.size * isz(x2d.dtype) + w_t.size * isz(w_t.dtype)
                        + b2d.size * 4 + r2d.size * isz(r2d.dtype)
                        + tokens * H * isz(out_dtype)),
    )

    io_aliases = {}
    if alias_residual and jnp.dtype(r2d.dtype) == jnp.dtype(out_dtype):
        io_aliases = {3: 0}   # write the output into the residual's HBM buffer

    if nk == 1:
        kernel = _ffn_output_kernel
        grid_spec = pltpu.PrefetchScalarGridSpec(
            num_scalar_prefetch=0,
            grid=(n_tok_tiles,),
            in_specs=[
                pl.BlockSpec((tm, I), lambda i: (i, 0)),    # activations (streamed)
                _resident_spec((I, H), lambda i: (0, 0)),   # weight (resident)
                _resident_spec((1, H), lambda i: (0, 0)),   # bias (resident)
                pl.BlockSpec((tm, H), lambda i: (i, 0)),    # residual (streamed)
            ],
            out_specs=pl.BlockSpec((tm, H), lambda i: (i, 0)),
        )
        dim_sem = ("parallel",)
    else:
        kernel = _ffn_output_kernel_ktiled
        grid_spec = pltpu.PrefetchScalarGridSpec(
            num_scalar_prefetch=0,
            grid=(n_tok_tiles, nk),
            in_specs=[
                pl.BlockSpec((tm, tk), lambda i, k: (i, k)),      # activations
                pl.BlockSpec((tk, H), lambda i, k: (k, 0)),       # weight (K-tiled)
                _resident_spec((1, H), lambda i, k: (0, 0)),      # bias (resident)
                pl.BlockSpec((tm, H), lambda i, k: (i, 0)),       # residual
            ],
            out_specs=pl.BlockSpec((tm, H), lambda i, k: (i, 0)),
            scratch_shapes=[pltpu.VMEM((tm, H), jnp.float32)],
        )
        dim_sem = ("parallel", "arbitrary")

    out = pl.pallas_call(
        kernel,
        out_shape=jax.ShapeDtypeStruct((tokens, H), out_dtype),
        grid_spec=grid_spec,
        compiler_params=pltpu.CompilerParams(
            dimension_semantics=dim_sem,
            vmem_limit_bytes=vmem_limit,
        ),
        cost_estimate=cost,
        input_output_aliases=io_aliases,
    )(x2d, w_t, b2d, r2d)
    return out.reshape(B, S, H)


if __name__ == "__main__":
    # Small, lane-aligned config (BERT-style 4x expansion): hidden_size=128,
    # intermediate_size=512, batch=2, seq=16 -> 32 tokens (single full-extent
    # token tile), lane-dense (H=128) output stores.
    B, S, H, I = 2, 16, 128, 512
    key = jax.random.PRNGKey(0)
    k1, k2, k3, k4 = jax.random.split(key, 4)

    hidden_states = jax.random.normal(k1, (B, S, I), dtype=jnp.float32)
    input_tensor = jax.random.normal(k2, (B, S, H), dtype=jnp.float32)
    # PyTorch nn.Linear parameter shapes: W (H, I), b (H,).
    weight = jax.random.normal(k3, (H, I), dtype=jnp.float32) * 0.02
    bias = jax.random.normal(k4, (H,), dtype=jnp.float32) * 0.02

    # Plain-JAX reference.
    ref = (hidden_states.reshape(-1, I) @ weight.T + bias).reshape(B, S, H)
    ref = ref + input_tensor

    # Default path: bf16 MXU operands, f32 accumulation + epilogue.
    out_bf16 = jax.block_until_ready(
        imiter_output(hidden_states, input_tensor, weight, bias))
    assert out_bf16.shape == (B, S, H)
    assert jnp.allclose(out_bf16, ref, atol=5e-2, rtol=5e-2), \
        "bf16-operand kernel mismatch vs reference"

    # Full-precision opt-in path.
    out_f32 = jax.block_until_ready(
        imiter_output(hidden_states, input_tensor, weight, bias,
                      compute_dtype=jnp.float32))
    assert jnp.allclose(out_f32, ref, atol=2e-2, rtol=2e-2), \
        "f32 kernel mismatch vs reference"

    print("KERNEL_OK")
</pallas_src>

<mosaic_0001>
module attributes {stable_mosaic.version = 11 : i64} {
  func.func @_ffn_output_kernel(%arg0: i32, %arg1: memref<32x512xbf16, #tpu.memory_space<vmem>>, %arg2: memref<512x128xbf16, #tpu.memory_space<vmem>>, %arg3: memref<1x128xf32, #tpu.memory_space<vmem>>, %arg4: memref<32x128xf32, #tpu.memory_space<vmem>>, %arg5: memref<32x128xf32, #tpu.memory_space<vmem>>) attributes {dimension_semantics = [#tpu.dimension_semantics<parallel>], iteration_bounds = array<i64: 1>, scalar_prefetch = 0 : i64, scratch_operands = 0 : i64, tpu.core_type = #tpu.core_type<tc>, window_params = [{transform_indices = @transform_0, window_bounds = array<i64: 32, 512>}, {pipeline_mode = #tpu.pipeline_mode<synchronous>, transform_indices = @transform_1, window_bounds = array<i64: 512, 128>}, {pipeline_mode = #tpu.pipeline_mode<synchronous>, transform_indices = @transform_2, window_bounds = array<i64: 1, 128>}, {transform_indices = @transform_3, window_bounds = array<i64: 32, 128>}, {transform_indices = @transform_4, window_bounds = array<i64: 32, 128>}]} {
    %c0 = arith.constant 0 : index
    %c0_0 = arith.constant 0 : index
    %0 = vector.load %arg1[%c0, %c0_0] : memref<32x512xbf16, #tpu.memory_space<vmem>>, vector<32x512xbf16>
    %c0_1 = arith.constant 0 : index
    %c0_2 = arith.constant 0 : index
    %1 = vector.load %arg2[%c0_1, %c0_2] : memref<512x128xbf16, #tpu.memory_space<vmem>>, vector<512x128xbf16>
    %cst = arith.constant dense<0.000000e+00> : vector<32x128xf32>
    %2 = tpu.matmul %0, %1, %cst {dimension_numbers = #tpu.dot_dimension_numbers<[1], [0], [0], [1], [0, 0, 1, 1], [], []>} : vector<32x512xbf16>, vector<512x128xbf16>, vector<32x128xf32> -> vector<32x128xf32>
    %c0_3 = arith.constant 0 : index
    %c0_4 = arith.constant 0 : index
    %3 = vector.load %arg3[%c0_3, %c0_4] : memref<1x128xf32, #tpu.memory_space<vmem>>, vector<1x128xf32>
    %4 = vector.broadcast %3 : vector<1x128xf32> to vector<32x128xf32>
    %5 = arith.addf %2, %4 : vector<32x128xf32>
    %c0_5 = arith.constant 0 : index
    %c0_6 = arith.constant 0 : index
    %6 = vector.load %arg4[%c0_5, %c0_6] : memref<32x128xf32, #tpu.memory_space<vmem>>, vector<32x128xf32>
    %7 = arith.addf %5, %6 : vector<32x128xf32>
    %c0_7 = arith.constant 0 : index
    %c0_8 = arith.constant 0 : index
    %8 = vector.load %arg5[%c0_7, %c0_8] : memref<32x128xf32, #tpu.memory_space<vmem>>, vector<32x128xf32>
    tpu.vector_store %arg5[%c0_7, %c0_8], %7 {strides = array<i32>} : memref<32x128xf32, #tpu.memory_space<vmem>>, vector<32x128xf32>,
    return
  }
  func.func @transform_0(%arg0: i32) -> (i32, i32) {
    %c0_i32 = arith.constant 0 : i32
    %c0_i32_0 = arith.constant 0 : i32
    return %arg0, %c0_i32 : i32, i32
  }
  func.func @transform_1(%arg0: i32) -> (i32, i32) {
    %c0_i32 = arith.constant 0 : i32
    %c0_i32_0 = arith.constant 0 : i32
    %c0_i32_1 = arith.constant 0 : i32
    return %c0_i32, %c0_i32_0 : i32, i32
  }
  func.func @transform_2(%arg0: i32) -> (i32, i32) {
    %c0_i32 = arith.constant 0 : i32
    %c0_i32_0 = arith.constant 0 : i32
    %c0_i32_1 = arith.constant 0 : i32
    return %c0_i32, %c0_i32_0 : i32, i32
  }
  func.func @transform_3(%arg0: i32) -> (i32, i32) {
    %c0_i32 = arith.constant 0 : i32
    %c0_i32_0 = arith.constant 0 : i32
    return %arg0, %c0_i32 : i32, i32
  }
  func.func @transform_4(%arg0: i32) -> (i32, i32) {
    %c0_i32 = arith.constant 0 : i32
    %c0_i32_0 = arith.constant 0 : i32
    return %arg0, %c0_i32 : i32, i32
  }
}

</mosaic_0001>

<llo_original>
// kernel: tpu_custom_call.1
$region0: #{tpu_custom_call.1}
  #allocation0 [shape = 'u32[]', space=smem, size = 0x4, offset = 0x4, fixed_abs, tag = 'smem constant byte address 0x4 - core index']
  #allocation1 [shape = 'u32[72,128]{1,0:T(1,128)}', space=vmem, size = 0x9000, scoped, tag = 'internal scratch']
  %s0 = inlined_call_operand.hbm [shape: bf16[32,512], index: 0, kind: input, shape index: {}]
  %s1 = inlined_call_operand.hbm [shape: bf16[512,128], index: 1, kind: input, shape index: {}]
  %s2 = inlined_call_operand.vmem [shape: f32[1,128], index: 2, kind: input, shape index: {}]
  %s3 = inlined_call_operand.hbm [shape: f32[32,128], index: 3, kind: input, shape index: {}]
  %s4 = inlined_call_operand.hbm [shape: f32[32,128], index: 4, kind: output, shape index: {}]
  %s5 = sld [smem:[#allocation0]]
  $region38: #{tpu_custom_call.1} parent=0
    _
  %s7 = ssub.s32 1, %s5
  %s8 = scalar_select 0, %s7, %s5
  $region1: #{tpu_custom_call.1} parent=0
    #allocation2 [shape = 'u8[32768]{0}', space=vmem, size = 0x8000, scoped, tag = 'input window, operand 0, single buffered']
    #allocation3 [shape = 's32[1]{0}', space=sflag, size = 0x4, scoped, tag = 'scoped memory for tpu_custom_call.1']
    #allocation4 [shape = 's32[1]{0}', space=sflag, size = 0x4, scoped, tag = 'scoped memory for tpu_custom_call.1']
    #allocation5 [shape = 'u8[131072]{0}', space=vmem, size = 0x20000, scoped, tag = 'input window, operand 1, single buffered']
    #allocation6 [shape = 's32[1]{0}', space=sflag, size = 0x4, scoped, tag = 'scoped memory for tpu_custom_call.1']
    #allocation7 [shape = 'u8[16384]{0}', space=vmem, size = 0x4000, scoped, tag = 'input window, operand 3, single buffered']
    #allocation8 [shape = 'u8[16384]{0}', space=vmem, size = 0x4000, scoped, tag = 'output window, operand 0, single buffered']
    %9 = vsyncpa [#allocation3], 0
    %10 = vsyncpa [#allocation6], 0
    %11 = vsyncpa [#allocation4], 0
    // Predicated region
    $region2: #{tpu_custom_call.1} parent=1 // pred_check
      _
    $region3: #{tpu_custom_call.1} parent=1 // pred_check_branch
      %13 = sbr.rel (0) target = $region5
    $region4: #{tpu_custom_call.1} parent=1 // pred_region
      %15 = vsyncadd [#allocation3], 0
      %s16 = sshll.u32 %s0, 4
      %s17 = int_to_ptr.hbm [resolvable:$true] %s16
      %s18 = sshll.u32 [#allocation2], 4
      %s19 = int_to_ptr.vmem [resolvable:$true] %s18
      %24 = dma.hbm_to_vmem [thread:$0]  %s17, 1024, %s19, [#allocation3], 256, 256, 16
    $region5: #{tpu_custom_call.1} parent=1 // pred_fallthru
      _
    // Predicated region
    $region6: #{tpu_custom_call.1} parent=1 // pred_check
      _
    $region7: #{tpu_custom_call.1} parent=1 // pred_check_branch
      %26 = sbr.rel (0) target = $region9
    $region8: #{tpu_custom_call.1} parent=1 // pred_region
      %28 = vsyncadd [#allocation6], 0
      %s29 = sshll.u32 %s1, 4
      %s30 = int_to_ptr.hbm [resolvable:$true] %s29
      %s31 = sshll.u32 [#allocation5], 4
      %s32 = int_to_ptr.vmem [resolvable:$true] %s31
      %37 = dma.hbm_to_vmem [thread:$0]  %s30, 4096, %s32, [#allocation6], 64, 64, 4
    $region9: #{tpu_custom_call.1} parent=1 // pred_fallthru
      _
    // Predicated region
    $region10: #{tpu_custom_call.1} parent=1 // pred_check
      _
    $region11: #{tpu_custom_call.1} parent=1 // pred_check_branch
      %39 = sbr.rel (0) target = $region13
    $region12: #{tpu_custom_call.1} parent=1 // pred_region
      _
    $region13: #{tpu_custom_call.1} parent=1 // pred_fallthru
      _
    // Predicated region
    $region14: #{tpu_custom_call.1} parent=1 // pred_check
      _
    $region15: #{tpu_custom_call.1} parent=1 // pred_check_branch
      %41 = sbr.rel (0) target = $region17
    $region16: #{tpu_custom_call.1} parent=1 // pred_region
      %43 = vsyncadd [#allocation6], 0
      %s44 = sshll.u32 %s3, 4
      %s45 = int_to_ptr.hbm [resolvable:$true] %s44
      %s46 = sshll.u32 [#allocation7], 4
      %s47 = int_to_ptr.vmem [resolvable:$true] %s46
      %52 = dma.hbm_to_vmem [thread:$0]  %s45, 512, %s47, [#allocation6], 128, 128, 8
    $region17: #{tpu_custom_call.1} parent=1 // pred_fallthru
      _
    // Predicated region
    $region18: #{tpu_custom_call.1} parent=1 // pred_check
      _
    $region19: #{tpu_custom_call.1} parent=1 // pred_check_branch
      %54 = sbr.rel (0) target = $region21
    $region20: #{tpu_custom_call.1} parent=1 // pred_region
      %56 = dma.done [#allocation3], 1024
    $region21: #{tpu_custom_call.1} parent=1 // pred_fallthru
      _
    // Predicated region
    $region22: #{tpu_custom_call.1} parent=1 // pred_check
      _
    $region23: #{tpu_custom_call.1} parent=1 // pred_check_branch
      %58 = sbr.rel (0) target = $region25
    $region24: #{tpu_custom_call.1} parent=1 // pred_region
      %60 = dma.done [#allocation6], 4096
    $region25: #{tpu_custom_call.1} parent=1 // pred_fallthru
      _
    // Predicated region
    $region26: #{tpu_custom_call.1} parent=1 // pred_check
      _
    $region27: #{tpu_custom_call.1} parent=1 // pred_check_branch
      %62 = sbr.rel (0) target = $region29
    $region28: #{tpu_custom_call.1} parent=1 // pred_region
      %64 = dma.done [#allocation6], 512
    $region29: #{tpu_custom_call.1} parent=1 // pred_fallthru
      _
    %v65 = vld [vmem:[#allocation2] sm:$0xff]
    %v66 = vld [vmem:[#allocation2 + $0x8] sm:$0xff]
    %v67 = vld [vmem:[#allocation2 + $0x10] sm:$0xff]
    %v68 = vld [vmem:[#allocation2 + $0x18] sm:$0xff]
    %v69 = vld [vmem:[#allocation2 + $0x20] sm:$0xff]
    %v70 = vld [vmem:[#allocation2 + $0x28] sm:$0xff]
    %v71 = vld [vmem:[#allocation2 + $0x30] sm:$0xff]
    %v72 = vld [vmem:[#allocation2 + $0x38] sm:$0xff]
    %v73 = vld [vmem:[#allocation5] sm:$0xf]
    %v74 = vld [vmem:[#allocation5 + $0x4] sm:$0xf]
    %v75 = vld [vmem:[#allocation5 + $0x8] sm:$0xf]
    %v76 = vld [vmem:[#allocation5 + $0xc] sm:$0xf]
    %v77 = vld [vmem:[#allocation5 + $0x10] sm:$0xf]
    %v78 = vld [vmem:[#allocation5 + $0x14] sm:$0xf]
    %v79 = vld [vmem:[#allocation5 + $0x18] sm:$0xf]
    %v80 = vld [vmem:[#allocation5 + $0x1c] sm:$0xf]
    %v81 = vld [vmem:[#allocation5 + $0x20] sm:$0xf]
    %v82 = vld [vmem:[#allocation5 + $0x24] sm:$0xf]
    %v83 = vld [vmem:[#allocation5 + $0x28] sm:$0xf]
    %v84 = vld [vmem:[#allocation5 + $0x2c] sm:$0xf]
    %v85 = vld [vmem:[#allocation5 + $0x30] sm:$0xf]
    %v86 = vld [vmem:[#allocation5 + $0x34] sm:$0xf]
    %v87 = vld [vmem:[#allocation5 + $0x38] sm:$0xf]
    %v88 = vld [vmem:[#allocation5 + $0x3c] sm:$0xf]
    %v89 = vld [vmem:[#allocation5 + $0x40] sm:$0xf]
    %v90 = vld [vmem:[#allocation5 + $0x44] sm:$0xf]
    %v91 = vld [vmem:[#allocation5 + $0x48] sm:$0xf]
    %v92 = vld [vmem:[#allocation5 + $0x4c] sm:$0xf]
    %v93 = vld [vmem:[#allocation5 + $0x50] sm:$0xf]
    %v94 = vld [vmem:[#allocation5 + $0x54] sm:$0xf]
    %v95 = vld [vmem:[#allocation5 + $0x58] sm:$0xf]
    %v96 = vld [vmem:[#allocation5 + $0x5c] sm:$0xf]
    %v97 = vld [vmem:[#allocation5 + $0x60] sm:$0xf]
    %v98 = vld [vmem:[#allocation5 + $0x64] sm:$0xf]
    %v99 = vld [vmem:[#allocation5 + $0x68] sm:$0xf]
    %v100 = vld [vmem:[#allocation5 + $0x6c] sm:$0xf]
    %v101 = vld [vmem:[#allocation5 + $0x70] sm:$0xf]
    %v102 = vld [vmem:[#allocation5 + $0x74] sm:$0xf]
    %v103 = vld [vmem:[#allocation5 + $0x78] sm:$0xf]
    %v104 = vld [vmem:[#allocation5 + $0x7c] sm:$0xf]
    %v105 = vld [vmem:[#allocation5 + $0x80] sm:$0xf]
    %v106 = vld [vmem:[#allocation5 + $0x84] sm:$0xf]
    %v107 = vld [vmem:[#allocation5 + $0x88] sm:$0xf]
    %v108 = vld [vmem:[#allocation5 + $0x8c] sm:$0xf]
    %v109 = vld [vmem:[#allocation5 + $0x90] sm:$0xf]
    %v110 = vld [vmem:[#allocation5 + $0x94] sm:$0xf]
    %v111 = vld [vmem:[#allocation5 + $0x98] sm:$0xf]
    %v112 = vld [vmem:[#allocation5 + $0x9c] sm:$0xf]
    %v113 = vld [vmem:[#allocation5 + $0xa0] sm:$0xf]
    %v114 = vld [vmem:[#allocation5 + $0xa4] sm:$0xf]
    %v115 = vld [vmem:[#allocation5 + $0xa8] sm:$0xf]
    %v116 = vld [vmem:[#allocation5 + $0xac] sm:$0xf]
    %v117 = vld [vmem:[#allocation5 + $0xb0] sm:$0xf]
    %v118 = vld [vmem:[#allocation5 + $0xb4] sm:$0xf]
    %v119 = vld [vmem:[#allocation5 + $0xb8] sm:$0xf]
    %v120 = vld [vmem:[#allocation5 + $0xbc] sm:$0xf]
    %v121 = vld [vmem:[#allocation5 + $0xc0] sm:$0xf]
    %v122 = vld [vmem:[#allocation5 + $0xc4] sm:$0xf]
    %v123 = vld [vmem:[#allocation5 + $0xc8] sm:$0xf]
    %v124 = vld [vmem:[#allocation5 + $0xcc] sm:$0xf]
    %v125 = vld [vmem:[#allocation5 + $0xd0] sm:$0xf]
    %v126 = vld [vmem:[#allocation5 + $0xd4] sm:$0xf]
    %v127 = vld [vmem:[#allocation5 + $0xd8] sm:$0xf]
    %v128 = vld [vmem:[#allocation5 + $0xdc] sm:$0xf]
    %v129 = vld [vmem:[#allocation5 + $0xe0] sm:$0xf]
    %v130 = vld [vmem:[#allocation5 + $0xe4] sm:$0xf]
    %v131 = vld [vmem:[#allocation5 + $0xe8] sm:$0xf]
    %v132 = vld [vmem:[#allocation5 + $0xec] sm:$0xf]
    %v133 = vld [vmem:[#allocation5 + $0xf0] sm:$0xf]
    %v134 = vld [vmem:[#allocation5 + $0xf4] sm:$0xf]
    %v135 = vld [vmem:[#allocation5 + $0xf8] sm:$0xf]
    %v136 = vld [vmem:[#allocation5 + $0xfc] sm:$0xf]
    %v137 = vld [vmem:[%s2] sm:$0x1]
    %v139 = vperm.slane %v137, 0
    %v149 = vunpack.c.l.b16 %v65
    %v150 = vunpack.c.h.b16 %v65
    %v151 = vunpack.c.l.b16 %v66
    %v152 = vunpack.c.h.b16 %v66
    %v153 = vunpack.c.l.b16 %v67
    %v154 = vunpack.c.h.b16 %v67
    %v155 = vunpack.c.l.b16 %v68
    %v156 = vunpack.c.h.b16 %v68
    %v157 = vunpack.c.l.b16 %v69
    %v158 = vunpack.c.h.b16 %v69
    %v159 = vunpack.c.l.b16 %v70
    %v160 = vunpack.c.h.b16 %v70
    %v161 = vunpack.c.l.b16 %v71
    %v162 = vunpack.c.h.b16 %v71
    %v163 = vunpack.c.l.b16 %v72
    %v164 = vunpack.c.h.b16 %v72
    %v165 = vpack.c.b16 %v153, %v149
    %v166 = vpack.c.b16 %v154, %v150
    %v167 = vpack.c.b16 %v155, %v151
    %v168 = vpack.c.b16 %v156, %v152
    %v169 = vpack.c.b16 %v161, %v157
    %v170 = vpack.c.b16 %v162, %v158
    %v171 = vpack.c.b16 %v163, %v159
    %v172 = vpack.c.b16 %v164, %v160
    %v245 = vunpack.c.l.b16 %v73
    %v246 = vunpack.c.l.b16 %v74
    %v247 = vunpack.c.l.b16 %v75
    %v248 = vunpack.c.l.b16 %v76
    %v249 = vunpack.c.l.b16 %v77
    %v250 = vunpack.c.l.b16 %v78
    %v251 = vunpack.c.l.b16 %v79
    %v252 = vunpack.c.l.b16 %v80
    %v253 = vunpack.c.l.b16 %v81
    %v254 = vunpack.c.l.b16 %v82
    %v255 = vunpack.c.l.b16 %v83
    %v256 = vunpack.c.l.b16 %v84
    %v257 = vunpack.c.l.b16 %v85
    %v258 = vunpack.c.l.b16 %v86
    %v259 = vunpack.c.l.b16 %v87
    %v260 = vunpack.c.l.b16 %v88
    %v261 = vunpack.c.l.b16 %v89
    %v262 = vunpack.c.l.b16 %v90
    %v263 = vunpack.c.l.b16 %v91
    %v264 = vunpack.c.l.b16 %v92
    %v265 = vunpack.c.l.b16 %v93
    %v266 = vunpack.c.l.b16 %v94
    %v267 = vunpack.c.l.b16 %v95
    %v268 = vunpack.c.l.b16 %v96
    %v269 = vunpack.c.l.b16 %v97
    %v270 = vunpack.c.l.b16 %v98
    %v271 = vunpack.c.l.b16 %v99
    %v272 = vunpack.c.l.b16 %v100
    %v273 = vunpack.c.l.b16 %v101
    %v274 = vunpack.c.l.b16 %v102
    %v275 = vunpack.c.l.b16 %v103
    %v276 = vunpack.c.l.b16 %v104
    %v277 = vunpack.c.l.b16 %v105
    %v278 = vunpack.c.l.b16 %v106
    %v279 = vunpack.c.l.b16 %v107
    %v280 = vunpack.c.l.b16 %v108
    %v281 = vunpack.c.l.b16 %v109
    %v282 = vunpack.c.l.b16 %v110
    %v283 = vunpack.c.l.b16 %v111
    %v284 = vunpack.c.l.b16 %v112
    %v285 = vunpack.c.l.b16 %v113
    %v286 = vunpack.c.l.b16 %v114
    %v287 = vunpack.c.l.b16 %v115
    %v288 = vunpack.c.l.b16 %v116
    %v289 = vunpack.c.l.b16 %v117
    %v290 = vunpack.c.l.b16 %v118
    %v291 = vunpack.c.l.b16 %v119
    %v292 = vunpack.c.l.b16 %v120
    %v293 = vunpack.c.l.b16 %v121
    %v294 = vunpack.c.l.b16 %v122
    %v295 = vunpack.c.l.b16 %v123
    %v296 = vunpack.c.l.b16 %v124
    %v297 = vunpack.c.l.b16 %v125
    %v298 = vunpack.c.l.b16 %v126
    %v299 = vunpack.c.l.b16 %v127
    %v300 = vunpack.c.l.b16 %v128
    %v301 = vunpack.c.l.b16 %v129
    %v302 = vunpack.c.l.b16 %v130
    %v303 = vunpack.c.l.b16 %v131
    %v304 = vunpack.c.l.b16 %v132
    %v305 = vunpack.c.l.b16 %v133
    %v306 = vunpack.c.l.b16 %v134
    %v307 = vunpack.c.l.b16 %v135
    %v308 = vunpack.c.l.b16 %v136
    %v309 = vpack.c.b16 %v246, %v245
    %v310 = vpack.c.b16 %v248, %v247
    %v311 = vpack.c.b16 %v250, %v249
    %v312 = vpack.c.b16 %v252, %v251
    %v313 = vpack.c.b16 %v254, %v253
    %v314 = vpack.c.b16 %v256, %v255
    %v315 = vpack.c.b16 %v258, %v257
    %v316 = vpack.c.b16 %v260, %v259
    %v317 = vpack.c.b16 %v262, %v261
    %v318 = vpack.c.b16 %v264, %v263
    %v319 = vpack.c.b16 %v266, %v265
    %v320 = vpack.c.b16 %v268, %v267
    %v321 = vpack.c.b16 %v270, %v269
    %v322 = vpack.c.b16 %v272, %v271
    %v323 = vpack.c.b16 %v274, %v273
    %v324 = vpack.c.b16 %v276, %v275
    %v325 = vpack.c.b16 %v278, %v277
    %v326 = vpack.c.b16 %v280, %v279
    %v327 = vpack.c.b16 %v282, %v281
    %v328 = vpack.c.b16 %v284, %v283
    %v329 = vpack.c.b16 %v286, %v285
    %v330 = vpack.c.b16 %v288, %v287
    %v331 = vpack.c.b16 %v290, %v289
    %v332 = vpack.c.b16 %v292, %v291
    %v333 = vpack.c.b16 %v294, %v293
    %v334 = vpack.c.b16 %v296, %v295
    %v335 = vpack.c.b16 %v298, %v297
    %v336 = vpack.c.b16 %v300, %v299
    %v337 = vpack.c.b16 %v302, %v301
    %v338 = vpack.c.b16 %v304, %v303
    %v339 = vpack.c.b16 %v306, %v305
    %v340 = vpack.c.b16 %v308, %v307
    %373 = vmatpush.bf16.msra.mxu0 %v316
    %374 = vmatpush.bf16.msra.mxu0 %v315
    %375 = vmatpush.bf16.msra.mxu0 %v314
    %376 = vmatpush.bf16.msra.mxu0 %v313
    %377 = vmatpush.bf16.msra.mxu0 %v312
    %378 = vmatpush.bf16.msra.mxu0 %v311
    %379 = vmatpush.bf16.msra.mxu0 %v310
    %380 = vmatpush.bf16.msra.mxu0 %v309
    %381 = vmatmul.bf16.gmra.mxu0 %v165
    %v382 = vpop.f32.mrf.mxu0
    %v383 = vadd.f32 %v139, %v382
    %v384 = vpop.f32.mrf.mxu0
    %v385 = vadd.f32 %v139, %v384
    %386 = vmatmul.bf16.gmra.mxu0 %v169
    %v387 = vpop.f32.mrf.mxu0
    %v388 = vadd.f32 %v139, %v387
    %v389 = vpop.f32.mrf.mxu0
    %v390 = vadd.f32 %v139, %v389
    %391 = vdwg.mxu0
    %392 = vmatpush.bf16.msra.mxu0 %v324
    %393 = vmatpush.bf16.msra.mxu0 %v323
    %394 = vmatpush.bf16.msra.mxu0 %v322
    %395 = vmatpush.bf16.msra.mxu0 %v321
    %396 = vmatpush.bf16.msra.mxu0 %v320
    %397 = vmatpush.bf16.msra.mxu0 %v319
    %398 = vmatpush.bf16.msra.mxu0 %v318
    %399 = vmatpush.bf16.msra.mxu0 %v317
    %400 = vmatmul.bf16.gmra.mxu0 %v166
    %v401 = vpop.f32.mrf.mxu0
    %v402 = vadd.f32 %v383, %v401
    %v403 = vpop.f32.mrf.mxu0
    %v404 = vadd.f32 %v385, %v403
    %405 = vmatmul.bf16.gmra.mxu0 %v170
    %v406 = vpop.f32.mrf.mxu0
    %v407 = vadd.f32 %v388, %v406
    %v408 = vpop.f32.mrf.mxu0
    %v409 = vadd.f32 %v390, %v408
    %410 = vdwg.mxu0
    %411 = vmatpush.bf16.msra.mxu0 %v332
    %412 = vmatpush.bf16.msra.mxu0 %v331
    %413 = vmatpush.bf16.msra.mxu0 %v330
    %414 = vmatpush.bf16.msra.mxu0 %v329
    %415 = vmatpush.bf16.msra.mxu0 %v328
    %416 = vmatpush.bf16.msra.mxu0 %v327
    %417 = vmatpush.bf16.msra.mxu0 %v326
    %418 = vmatpush.bf16.msra.mxu0 %v325
    %419 = vmatmul.bf16.gmra.mxu0 %v167
    %v420 = vpop.f32.mrf.mxu0
    %v421 = vadd.f32 %v402, %v420
    %v422 = vpop.f32.mrf.mxu0
    %v423 = vadd.f32 %v404, %v422
    %424 = vmatmul.bf16.gmra.mxu0 %v171
    %v425 = vpop.f32.mrf.mxu0
    %v426 = vadd.f32 %v407, %v425
    %v427 = vpop.f32.mrf.mxu0
    %v428 = vadd.f32 %v409, %v427
    %429 = vdwg.mxu0
    %430 = vmatpush.bf16.msra.mxu0 %v340
    %431 = vmatpush.bf16.msra.mxu0 %v339
    %432 = vmatpush.bf16.msra.mxu0 %v338
    %433 = vmatpush.bf16.msra.mxu0 %v337
    %434 = vmatpush.bf16.msra.mxu0 %v336
    %435 = vmatpush.bf16.msra.mxu0 %v335
    %436 = vmatpush.bf16.msra.mxu0 %v334
    %437 = vmatpush.bf16.msra.mxu0 %v333
    %438 = vmatmul.bf16.gmra.mxu0 %v168
    %v439 = vpop.f32.mrf.mxu0
    %v440 = vadd.f32 %v421, %v439
    %v441 = vpop.f32.mrf.mxu0
    %v442 = vadd.f32 %v423, %v441
    %443 = vmatmul.bf16.gmra.mxu0 %v172
    %v444 = vpop.f32.mrf.mxu0
    %v445 = vadd.f32 %v426, %v444
    %v446 = vpop.f32.mrf.mxu0
    %v447 = vadd.f32 %v428, %v446
    %448 = vdwg.mxu0
    %v449 = vld [vmem:[#allocation7] sm:$0xff]
    %v450 = vld [vmem:[#allocation7 + $0x8] sm:$0xff]
    %v451 = vld [vmem:[#allocation7 + $0x10] sm:$0xff]
    %v452 = vld [vmem:[#allocation7 + $0x18] sm:$0xff]
    %v453 = vadd.f32 %v440, %v449
    %v454 = vadd.f32 %v442, %v450
    %v455 = vadd.f32 %v445, %v451
    %v456 = vadd.f32 %v447, %v452
    %457 = vst [vmem:[#allocation8] sm:$0xff] %v453
    %458 = vst [vmem:[#allocation8 + $0x8] sm:$0xff] %v454
    %459 = vst [vmem:[#allocation8 + $0x10] sm:$0xff] %v455
    %460 = vst [vmem:[#allocation8 + $0x18] sm:$0xff] %v456
    // Predicated region
    $region30: #{tpu_custom_call.1} parent=1 // pred_check
      _
    $region31: #{tpu_custom_call.1} parent=1 // pred_check_branch
      %462 = sbr.rel (0) target = $region33
    $region32: #{tpu_custom_call.1} parent=1 // pred_region
      %464 = vsyncadd [#allocation4], 0
      %s465 = sshll.u32 [#allocation8], 4
      %s466 = int_to_ptr.vmem [resolvable:$true] %s465
      %s467 = sshll.u32 %s4, 4
      %s468 = int_to_ptr.hbm [resolvable:$true] %s467
      %473 = dma.vmem_to_hbm [thread:$0]  %s466, 512, %s468, [#allocation4], 128, 128, 8
    $region33: #{tpu_custom_call.1} parent=1 // pred_fallthru
      _
    // Predicated region
    $region34: #{tpu_custom_call.1} parent=1 // pred_check
      _
    $region35: #{tpu_custom_call.1} parent=1 // pred_check_branch
      %475 = sbr.rel (0) target = $region37
    $region36: #{tpu_custom_call.1} parent=1 // pred_region
      %477 = dma.done [#allocation4], 512
    $region37: #{tpu_custom_call.1} parent=1 // pred_fallthru
      _
    %478 = vsyncpa [#allocation3], 1
    %479 = vsyncpa [#allocation6], 1
    %480 = vsyncpa [#allocation4], 1

</llo_original>
